<compile_context>
chip_gen: v7x
topology: tpu7x:2x2x1
jax: 0.10.0
libtpu: 0.0.40
codegen_flags: <defaults>
</compile_context>

<pallas_src>
import jax
import jax.numpy as jnp
from jax import lax
from jax.experimental import pallas as pl
from jax.experimental.pallas import tpu as pltpu

LANE = 128  # TPU lane width; all hidden widths (64/32/16/2*n_out) are <= 128.


def _round_up(v: int, m: int) -> int:
    return -(-v // m) * m


# ----------------------------------------------------------------------------
# Offline packing: all weights + biases -> one (ROWS, 128) f32 slab.
# Row layout (all offsets multiples of 8, all blocks full 128 lanes):
#   [0        : p_in      ]  W1  (n_in x 64 in top-left, zeros elsewhere)
#   [p_in     : p_in+128  ]  W2  (64 x 32  in top-left)
#   [p_in+128 : p_in+256  ]  W3  (32 x 16  in top-left)
#   [p_in+256 : p_in+384  ]  WH  (16 x 2*n_out = [wmu | wstd])
#   [r_b      : r_b+1     ]  b1  (lane-padded to 128)
#   [r_b+8    : r_b+9     ]  b2
#   [r_b+16   : r_b+17    ]  b3
#   [r_b+24   : r_b+25    ]  bh = [bmu | bstd]
# Zero padding guarantees the padded lanes/rows contribute exactly 0, so the
# padded matmuls are numerically identical to the unpadded network.
# ----------------------------------------------------------------------------
def pack_params(params, n_in: int, n_out: int):
    assert 2 * n_out <= LANE, "fused head must fit in one 128-lane tile"
    p_in = _round_up(max(n_in, 1), 8)

    r_w2 = p_in
    r_w3 = r_w2 + LANE
    r_wh = r_w3 + LANE
    r_b = r_wh + LANE
    rows = _round_up(r_b + 32, 8)

    wh = jnp.concatenate([params["wmu"], params["wstd"]], axis=1)  # (16, 2*n_out)
    bh = jnp.concatenate([params["bmu"], params["bstd"]], axis=1)  # (1, 2*n_out)

    slab = jnp.zeros((rows, LANE), jnp.float32)

    def put(s, arr, r0):
        arr = jnp.asarray(arr, jnp.float32)
        return s.at[r0:r0 + arr.shape[0], 0:arr.shape[1]].set(arr)

    slab = put(slab, params["w1"], 0)
    slab = put(slab, params["w2"], r_w2)
    slab = put(slab, params["w3"], r_w3)
    slab = put(slab, wh, r_wh)
    slab = put(slab, params["b1"], r_b + 0)
    slab = put(slab, params["b2"], r_b + 8)
    slab = put(slab, params["b3"], r_b + 16)
    slab = put(slab, bh, r_b + 24)

    offs = dict(p_in=p_in, r_w2=r_w2, r_w3=r_w3, r_wh=r_wh, r_b=r_b)
    return slab, offs


def _make_actor_kernel(offs, n_in: int, n_out: int, action_bound: float):
    p_in = offs["p_in"]
    r_w2, r_w3, r_wh, r_b = offs["r_w2"], offs["r_w3"], offs["r_wh"], offs["r_b"]

    def actor_kernel(x_ref, p_ref, out_ref, xp_ref):
        # --- In-kernel zero-extension of x: (tb, n_in) -> (tb, p_in) ---------
        # (zero the scratch, masked-store the raw features into the left lanes)
        if n_in < p_in:
            xp_ref[...] = jnp.zeros_like(xp_ref)
        xp_ref[:, 0:n_in] = x_ref[...]
        x = xp_ref[...]                             # (tb, p_in)

        # Static slices of the packed slab (8-row-aligned, full 128 lanes).
        # NOTE: pipeline_mode=pl.Buffered(1) on the weight spec would drop its
        # redundant second VMEM buffer; skipped here (negligible at this size).
        w1 = p_ref[0:p_in, :]                       # (p_in, 128)
        w2 = p_ref[r_w2:r_w2 + LANE, :]             # (128, 128)
        w3 = p_ref[r_w3:r_w3 + LANE, :]             # (128, 128)
        wh = p_ref[r_wh:r_wh + LANE, :]             # (128, 128)
        b1 = p_ref[r_b + 0:r_b + 1, :]              # (1, 128)
        b2 = p_ref[r_b + 8:r_b + 9, :]
        b3 = p_ref[r_b + 16:r_b + 17, :]
        bh = p_ref[r_b + 24:r_b + 25, :]

        # fc1/fc2/fc3 + relu (padded lanes/rows stay exactly zero).
        h1 = jnp.maximum(jnp.dot(x, w1, preferred_element_type=jnp.float32) + b1, 0.0)
        h2 = jnp.maximum(jnp.dot(h1, w2, preferred_element_type=jnp.float32) + b2, 0.0)
        h3 = jnp.maximum(jnp.dot(h2, w3, preferred_element_type=jnp.float32) + b3, 0.0)

        # Fused mu/std head: one matmul, lanes [0:n_out)=mu logits,
        # lanes [n_out:2*n_out)=std logits, remaining lanes are don't-care.
        z = jnp.dot(h3, wh, preferred_element_type=jnp.float32) + bh   # (tb, 128)

        lane = lax.broadcasted_iota(jnp.int32, (1, LANE), 1)           # single row
        mu_all = jnp.tanh(z) * action_bound
        std_all = jnp.logaddexp(z, 0.0)             # numerically stable softplus
        out_ref[...] = jnp.where(lane < n_out, mu_all, std_all).astype(out_ref.dtype)

    return actor_kernel


def _default_tiling():
    """(small_batch_max, tile_cap) tuned per TPU generation."""
    try:
        kind = jax.devices()[0].device_kind.lower()
    except Exception:
        kind = ""
    if "v5" in kind or "v6" in kind:
        # Single TensorCore, 128 MiB VMEM: favor fewer, bigger blocks.
        return 2048, 4096
    # v7x (2 TCs/chip, 64 MiB VMEM) and default: favor >=2 modest parallel tiles.
    return 512, 2048


def actor_net_forward(x, packed, offs, n_out: int, action_bound, *,
                      small_batch_max: int | None = None,
                      tile_cap: int | None = None,
                      out_dtype=jnp.float32):
    """x: (B, n_in) f32 (unpadded). packed/offs: from pack_params. Returns (mu, std)."""
    b, n_in = x.shape
    p_in = offs["p_in"]
    x = x.astype(jnp.float32)

    d_small, d_cap = _default_tiling()
    small_batch_max = d_small if small_batch_max is None else small_batch_max
    tile_cap = d_cap if tile_cap is None else tile_cap

    if b <= small_batch_max:
        # Latency-critical path (RL stepping): one block, no padding anywhere.
        tb, b_pad, xg = b, b, x
    else:
        # Throughput path: >=2 parallel grid steps; pad batch to a tile multiple
        # (never a single giant block -> VMEM-safe and keeps both TCs busy).
        tb = min(tile_cap, _round_up((b + 1) // 2, 8))
        b_pad = _round_up(b, tb)
        xg = x if b_pad == b else jnp.pad(x, ((0, b_pad - b), (0, 0)))
    grid = (b_pad // tb,)

    kernel = _make_actor_kernel(offs, n_in, n_out, float(action_bound))

    out = pl.pallas_call(
        kernel,
        out_shape=jax.ShapeDtypeStruct((b_pad, LANE), out_dtype),
        grid_spec=pltpu.PrefetchScalarGridSpec(
            num_scalar_prefetch=0,
            grid=grid,
            in_specs=[
                pl.BlockSpec((tb, n_in), lambda i: (i, 0)),        # raw features
                pl.BlockSpec(packed.shape, lambda i: (0, 0)),      # weights resident
            ],
            out_specs=pl.BlockSpec((tb, LANE), lambda i: (i, 0)),  # lane-dense output
            scratch_shapes=[pltpu.VMEM((tb, p_in), jnp.float32)],  # x zero-extension
        ),
        compiler_params=pltpu.CompilerParams(
            dimension_semantics=("parallel",),
        ),
    )(xg, packed)

    mu = out[:b, 0:n_out]
    std = out[:b, n_out:2 * n_out]
    return mu, std


def init_params(key, n_in, n_out):
    """Deterministic synthetic init (shapes match Actor_Net.__init__)."""
    sizes = [(n_in, 64), (64, 32), (32, 16), (16, n_out), (16, n_out)]
    names = ["1", "2", "3", "mu", "std"]
    params = {}
    keys = jax.random.split(key, len(sizes))
    for k, (fan_in, fan_out), name in zip(keys, sizes, names):
        kw, kb = jax.random.split(k)
        bound = 1.0 / jnp.sqrt(fan_in)
        params[f"w{name}"] = jax.random.uniform(
            kw, (fan_in, fan_out), jnp.float32, -bound, bound
        )
        params[f"b{name}"] = jax.random.uniform(
            kb, (1, fan_out), jnp.float32, -bound, bound
        )
    return params


def actor_net_reference(x, params, action_bound):
    """Pure-JAX reference for correctness check."""
    h1 = jax.nn.relu(x @ params["w1"] + params["b1"])
    h2 = jax.nn.relu(h1 @ params["w2"] + params["b2"])
    h3 = jax.nn.relu(h2 @ params["w3"] + params["b3"])
    mu = jnp.tanh(h3 @ params["wmu"] + params["bmu"]) * action_bound
    std = jax.nn.softplus(h3 @ params["wstd"] + params["bstd"])
    return mu, std


if __name__ == "__main__":
    # Pendulum-v0: state dim 3, action dim 1, action bound 2.0
    n_in, n_out, action_bound = 3, 1, 2.0

    key = jax.random.PRNGKey(0)
    k_params, k_x_small, k_x_big, k_x_rag = jax.random.split(key, 4)
    params = init_params(k_params, n_in, n_out)
    packed, offs = pack_params(params, n_in, n_out)

    def check(x, name, **kw):
        mu, std = actor_net_forward(x, packed, offs, n_out, action_bound, **kw)
        mu, std = jax.block_until_ready(mu), jax.block_until_ready(std)
        mu_ref, std_ref = actor_net_reference(x, params, action_bound)
        assert jnp.allclose(mu, mu_ref, atol=1e-5), f"mu mismatch ({name})"
        assert jnp.allclose(std, std_ref, atol=1e-5), f"std mismatch ({name})"

    # 1) Small batch (single block, no padding) — the RL stepping use case.
    check(jax.random.normal(k_x_small, (8, n_in), jnp.float32), "batch=8")

    # 2) Large batch with default (generation-aware) tiling.
    check(jax.random.normal(k_x_big, (1024, n_in), jnp.float32), "batch=1024")

    # 3) Ragged large batch — forces the multi-step grid + batch-padding path.
    check(jax.random.normal(k_x_rag, (1000, n_in), jnp.float32), "batch=1000",
          small_batch_max=256, tile_cap=512)

    print("KERNEL_OK")
</pallas_src>

<mosaic_0001>
module attributes {stable_mosaic.version = 11 : i64} {
  func.func @actor_kernel(%arg0: i32, %arg1: memref<8x3xf32, #tpu.memory_space<vmem>>, %arg2: memref<424x128xf32, #tpu.memory_space<vmem>>, %arg3: memref<8x128xf32, #tpu.memory_space<vmem>>, %arg4: memref<8x8xf32, #tpu.memory_space<vmem>>) attributes {dimension_semantics = [#tpu.dimension_semantics<parallel>], iteration_bounds = array<i64: 1>, scalar_prefetch = 0 : i64, scratch_operands = 1 : i64, tpu.core_type = #tpu.core_type<tc>, window_params = [{transform_indices = @transform_0, window_bounds = array<i64: 8, 3>}, {pipeline_mode = #tpu.pipeline_mode<synchronous>, transform_indices = @transform_1, window_bounds = array<i64: 424, 128>}, {transform_indices = @transform_2, window_bounds = array<i64: 8, 128>}]} {
    %cst = arith.constant 0.000000e+00 : f32
    %0 = vector.broadcast %cst : f32 to vector<8x8xf32>
    %c0 = arith.constant 0 : index
    %c0_0 = arith.constant 0 : index
    %1 = vector.load %arg4[%c0, %c0_0] : memref<8x8xf32, #tpu.memory_space<vmem>>, vector<8x8xf32>
    tpu.vector_store %arg4[%c0, %c0_0], %0 {strides = array<i32>} : memref<8x8xf32, #tpu.memory_space<vmem>>, vector<8x8xf32>,
    %c0_1 = arith.constant 0 : index
    %c0_2 = arith.constant 0 : index
    %2 = vector.load %arg1[%c0_1, %c0_2] : memref<8x3xf32, #tpu.memory_space<vmem>>, vector<8x3xf32>
    %c0_3 = arith.constant 0 : index
    %c0_4 = arith.constant 0 : index
    %3 = vector.load %arg4[%c0_3, %c0_4] : memref<8x8xf32, #tpu.memory_space<vmem>>, vector<8x3xf32>
    tpu.vector_store %arg4[%c0_3, %c0_4], %2 {strides = array<i32>} : memref<8x8xf32, #tpu.memory_space<vmem>>, vector<8x3xf32>,
    %c0_5 = arith.constant 0 : index
    %c0_6 = arith.constant 0 : index
    %4 = vector.load %arg4[%c0_5, %c0_6] : memref<8x8xf32, #tpu.memory_space<vmem>>, vector<8x8xf32>
    %c0_7 = arith.constant 0 : index
    %c0_8 = arith.constant 0 : index
    %5 = vector.load %arg2[%c0_7, %c0_8] : memref<424x128xf32, #tpu.memory_space<vmem>>, vector<8x128xf32>
    %c8 = arith.constant 8 : index
    %c0_9 = arith.constant 0 : index
    %6 = vector.load %arg2[%c8, %c0_9] : memref<424x128xf32, #tpu.memory_space<vmem>>, vector<128x128xf32>
    %c136 = arith.constant 136 : index
    %c0_10 = arith.constant 0 : index
    %7 = vector.load %arg2[%c136, %c0_10] : memref<424x128xf32, #tpu.memory_space<vmem>>, vector<128x128xf32>
    %c264 = arith.constant 264 : index
    %c0_11 = arith.constant 0 : index
    %8 = vector.load %arg2[%c264, %c0_11] : memref<424x128xf32, #tpu.memory_space<vmem>>, vector<128x128xf32>
    %c392 = arith.constant 392 : index
    %c0_12 = arith.constant 0 : index
    %9 = vector.load %arg2[%c392, %c0_12] : memref<424x128xf32, #tpu.memory_space<vmem>>, vector<1x128xf32>
    %c400 = arith.constant 400 : index
    %c0_13 = arith.constant 0 : index
    %10 = vector.load %arg2[%c400, %c0_13] : memref<424x128xf32, #tpu.memory_space<vmem>>, vector<1x128xf32>
    %c408 = arith.constant 408 : index
    %c0_14 = arith.constant 0 : index
    %11 = vector.load %arg2[%c408, %c0_14] : memref<424x128xf32, #tpu.memory_space<vmem>>, vector<1x128xf32>
    %c416 = arith.constant 416 : index
    %c0_15 = arith.constant 0 : index
    %12 = vector.load %arg2[%c416, %c0_15] : memref<424x128xf32, #tpu.memory_space<vmem>>, vector<1x128xf32>
    %cst_16 = arith.constant dense<0.000000e+00> : vector<8x128xf32>
    %13 = tpu.matmul %4, %5, %cst_16 {dimension_numbers = #tpu.dot_dimension_numbers<[1], [0], [0], [1], [0, 0, 1, 1], [], []>} : vector<8x8xf32>, vector<8x128xf32>, vector<8x128xf32> -> vector<8x128xf32>
    %14 = vector.broadcast %9 : vector<1x128xf32> to vector<8x128xf32>
    %15 = arith.addf %13, %14 : vector<8x128xf32>
    %cst_17 = arith.constant 0.000000e+00 : f32
    %16 = vector.broadcast %cst_17 : f32 to vector<8x128xf32>
    %17 = arith.maximumf %15, %16 : vector<8x128xf32>
    %cst_18 = arith.constant dense<0.000000e+00> : vector<8x128xf32>
    %18 = tpu.matmul %17, %6, %cst_18 {dimension_numbers = #tpu.dot_dimension_numbers<[1], [0], [0], [1], [0, 0, 1, 1], [], []>} : vector<8x128xf32>, vector<128x128xf32>, vector<8x128xf32> -> vector<8x128xf32>
    %19 = vector.broadcast %10 : vector<1x128xf32> to vector<8x128xf32>
    %20 = arith.addf %18, %19 : vector<8x128xf32>
    %cst_19 = arith.constant 0.000000e+00 : f32
    %21 = vector.broadcast %cst_19 : f32 to vector<8x128xf32>
    %22 = arith.maximumf %20, %21 : vector<8x128xf32>
    %cst_20 = arith.constant dense<0.000000e+00> : vector<8x128xf32>
    %23 = tpu.matmul %22, %7, %cst_20 {dimension_numbers = #tpu.dot_dimension_numbers<[1], [0], [0], [1], [0, 0, 1, 1], [], []>} : vector<8x128xf32>, vector<128x128xf32>, vector<8x128xf32> -> vector<8x128xf32>
    %24 = vector.broadcast %11 : vector<1x128xf32> to vector<8x128xf32>
    %25 = arith.addf %23, %24 : vector<8x128xf32>
    %cst_21 = arith.constant 0.000000e+00 : f32
    %26 = vector.broadcast %cst_21 : f32 to vector<8x128xf32>
    %27 = arith.maximumf %25, %26 : vector<8x128xf32>
    %cst_22 = arith.constant dense<0.000000e+00> : vector<8x128xf32>
    %28 = tpu.matmul %27, %8, %cst_22 {dimension_numbers = #tpu.dot_dimension_numbers<[1], [0], [0], [1], [0, 0, 1, 1], [], []>} : vector<8x128xf32>, vector<128x128xf32>, vector<8x128xf32> -> vector<8x128xf32>
    %29 = vector.broadcast %12 : vector<1x128xf32> to vector<8x128xf32>
    %30 = arith.addf %28, %29 : vector<8x128xf32>
    %31 = tpu.iota {dimensions = array<i32: 1>} : vector<1x128xi32>
    %32 = math.tanh %30 : vector<8x128xf32>
    %cst_23 = arith.constant 2.000000e+00 : f32
    %33 = vector.broadcast %cst_23 : f32 to vector<8x128xf32>
    %34 = arith.mulf %32, %33 : vector<8x128xf32>
    %cst_24 = arith.constant 0.000000e+00 : f32
    %35 = vector.broadcast %cst_24 : f32 to vector<8x128xf32>
    %36 = arith.maximumf %30, %35 : vector<8x128xf32>
    %37 = vector.broadcast %cst_24 : f32 to vector<8x128xf32>
    %38 = arith.subf %30, %37 : vector<8x128xf32>
    %39 = arith.cmpf one, %38, %38 : vector<8x128xf32>
    %40 = vector.broadcast %cst_24 : f32 to vector<8x128xf32>
    %41 = arith.addf %30, %40 : vector<8x128xf32>
    %42 = math.absf %38 : vector<8x128xf32>
    %cst_25 = arith.constant 0.000000e+00 : f32
    %43 = vector.broadcast %cst_25 : f32 to vector<8x128xf32>
    %44 = arith.subf %43, %42 : vector<8x128xf32>
    %45 = math.exp %44 : vector<8x128xf32>
    %46 = math.log1p %45 : vector<8x128xf32>
    %47 = arith.addf %36, %46 : vector<8x128xf32>
    %48 = arith.select %39, %41, %47 : vector<8x128xi1>, vector<8x128xf32>
    %c1_i32 = arith.constant 1 : i32
    %49 = vector.broadcast %c1_i32 : i32 to vector<1x128xi32>
    %50 = arith.cmpi slt, %31, %49 : vector<1x128xi32>
    %51 = vector.shape_cast %50 : vector<1x128xi1> to vector<1x128xi1>
    %52 = vector.broadcast %51 : vector<1x128xi1> to vector<8x128xi1>
    %53 = arith.select %52, %34, %48 : vector<8x128xi1>, vector<8x128xf32>
    %c0_26 = arith.constant 0 : index
    %c0_27 = arith.constant 0 : index
    %54 = vector.load %arg3[%c0_26, %c0_27] : memref<8x128xf32, #tpu.memory_space<vmem>>, vector<8x128xf32>
    tpu.vector_store %arg3[%c0_26, %c0_27], %53 {strides = array<i32>} : memref<8x128xf32, #tpu.memory_space<vmem>>, vector<8x128xf32>,
    return
  }
  func.func @transform_0(%arg0: i32) -> (i32, i32) {
    %c0_i32 = arith.constant 0 : i32
    %c0_i32_0 = arith.constant 0 : i32
    return %arg0, %c0_i32 : i32, i32
  }
  func.func @transform_1(%arg0: i32) -> (i32, i32) {
    %c0_i32 = arith.constant 0 : i32
    %c0_i32_0 = arith.constant 0 : i32
    %c0_i32_1 = arith.constant 0 : i32
    return %c0_i32, %c0_i32_0 : i32, i32
  }
  func.func @transform_2(%arg0: i32) -> (i32, i32) {
    %c0_i32 = arith.constant 0 : i32
    %c0_i32_0 = arith.constant 0 : i32
    return %arg0, %c0_i32 : i32, i32
  }
}

</mosaic_0001>

<llo_original>
// kernel: tpu_custom_call.1
$region0: #{tpu_custom_call.1}
  #allocation0 [shape = 'u32[]', space=smem, size = 0x4, offset = 0x4, fixed_abs, tag = 'smem constant byte address 0x4 - core index']
  #allocation1 [shape = 'u32[144,128]{1,0:T(1,128)}', space=vmem, size = 0x12000, scoped, tag = 'internal scratch']
  #allocation2 [shape = 'f32[8,8]{1,0:T(8,128)}', space=vmem, size = 0x1000, scoped, tag = 'scratch operand']
  %s0 = inlined_call_operand.vmem [shape: f32[8,3], index: 0, kind: input, shape index: {}]
  %s1 = inlined_call_operand.hbm [shape: f32[424,128], index: 1, kind: input, shape index: {}]
  %s2 = inlined_call_operand.hbm [shape: f32[8,128], index: 2, kind: output, shape index: {}]
  %s3 = sld [smem:[#allocation0]]
  $region22: #{tpu_custom_call.1} parent=0
    _
  %s5 = ssub.s32 1, %s3
  %s6 = scalar_select 0, %s5, %s3
  $region1: #{tpu_custom_call.1} parent=0
    #allocation3 [shape = 'u8[217088]{0}', space=vmem, size = 0x35000, scoped, tag = 'input window, operand 1, single buffered']
    #allocation4 [shape = 's32[1]{0}', space=sflag, size = 0x4, scoped, tag = 'scoped memory for tpu_custom_call.1']
    #allocation5 [shape = 's32[1]{0}', space=sflag, size = 0x4, scoped, tag = 'scoped memory for tpu_custom_call.1']
    #allocation6 [shape = 'u8[4096]{0}', space=vmem, size = 0x1000, scoped, tag = 'output window, operand 0, single buffered']
    %7 = vsyncpa [#allocation4], 0
    %8 = vsyncpa [#allocation5], 0
    // Predicated region
    $region2: #{tpu_custom_call.1} parent=1 // pred_check
      _
    $region3: #{tpu_custom_call.1} parent=1 // pred_check_branch
      %10 = sbr.rel (0) target = $region5
    $region4: #{tpu_custom_call.1} parent=1 // pred_region
      _
    $region5: #{tpu_custom_call.1} parent=1 // pred_fallthru
      _
    // Predicated region
    $region6: #{tpu_custom_call.1} parent=1 // pred_check
      _
    $region7: #{tpu_custom_call.1} parent=1 // pred_check_branch
      %12 = sbr.rel (0) target = $region9
    $region8: #{tpu_custom_call.1} parent=1 // pred_region
      %s14 = ssub.s32 6784, 6784
      %15 = vsyncadd [#allocation4], %s14
      %s16 = sshll.u32 [#allocation3], 4
      %s17 = int_to_ptr.vmem [resolvable:$true] %s16
      %22 = dma.hbm_to_vmem [thread:$0]  %s1, 6784, %s17, [#allocation4], 128, 128, 8
    $region9: #{tpu_custom_call.1} parent=1 // pred_fallthru
      _
    // Predicated region
    $region10: #{tpu_custom_call.1} parent=1 // pred_check
      _
    $region11: #{tpu_custom_call.1} parent=1 // pred_check_branch
      %24 = sbr.rel (0) target = $region13
    $region12: #{tpu_custom_call.1} parent=1 // pred_region
      %25 = dma.done [#allocation4], 6784
    $region13: #{tpu_custom_call.1} parent=1 // pred_fallthru
      _
    %vm26 = vcmask 64512
    %27 = vst.msk [vmem:[#allocation2] sm:$0xff] %vm26, 0.0
    %v28 = vld [vmem:[%s0] sm:$0xff]
    %vm29 = vcmask 23552
    %30 = vst.msk [vmem:[#allocation2] sm:$0xff] %vm29, %v28
    %v31 = vld [vmem:[#allocation2] sm:$0xff]
    %v32 = vld [vmem:[#allocation3] sm:$0xff]
    %v33 = vld [vmem:[#allocation3 + $0x8] sm:$0xff]
    %v34 = vld [vmem:[#allocation3 + $0x10] sm:$0xff]
    %v35 = vld [vmem:[#allocation3 + $0x18] sm:$0xff]
    %v36 = vld [vmem:[#allocation3 + $0x20] sm:$0xff]
    %v37 = vld [vmem:[#allocation3 + $0x28] sm:$0xff]
    %v38 = vld [vmem:[#allocation3 + $0x30] sm:$0xff]
    %v39 = vld [vmem:[#allocation3 + $0x38] sm:$0xff]
    %v40 = vld [vmem:[#allocation3 + $0x40] sm:$0xff]
    %v41 = vld [vmem:[#allocation3 + $0x48] sm:$0xff]
    %v42 = vld [vmem:[#allocation3 + $0x50] sm:$0xff]
    %v43 = vld [vmem:[#allocation3 + $0x58] sm:$0xff]
    %v44 = vld [vmem:[#allocation3 + $0x60] sm:$0xff]
    %v45 = vld [vmem:[#allocation3 + $0x68] sm:$0xff]
    %v46 = vld [vmem:[#allocation3 + $0x70] sm:$0xff]
    %v47 = vld [vmem:[#allocation3 + $0x78] sm:$0xff]
    %v48 = vld [vmem:[#allocation3 + $0x80] sm:$0xff]
    %v49 = vld [vmem:[#allocation3 + $0x88] sm:$0xff]
    %v50 = vld [vmem:[#allocation3 + $0x90] sm:$0xff]
    %v51 = vld [vmem:[#allocation3 + $0x98] sm:$0xff]
    %v52 = vld [vmem:[#allocation3 + $0xa0] sm:$0xff]
    %v53 = vld [vmem:[#allocation3 + $0xa8] sm:$0xff]
    %v54 = vld [vmem:[#allocation3 + $0xb0] sm:$0xff]
    %v55 = vld [vmem:[#allocation3 + $0xb8] sm:$0xff]
    %v56 = vld [vmem:[#allocation3 + $0xc0] sm:$0xff]
    %v57 = vld [vmem:[#allocation3 + $0xc8] sm:$0xff]
    %v58 = vld [vmem:[#allocation3 + $0xd0] sm:$0xff]
    %v59 = vld [vmem:[#allocation3 + $0xd8] sm:$0xff]
    %v60 = vld [vmem:[#allocation3 + $0xe0] sm:$0xff]
    %v61 = vld [vmem:[#allocation3 + $0xe8] sm:$0xff]
    %v62 = vld [vmem:[#allocation3 + $0xf0] sm:$0xff]
    %v63 = vld [vmem:[#allocation3 + $0xf8] sm:$0xff]
    %v64 = vld [vmem:[#allocation3 + $0x100] sm:$0xff]
    %v65 = vld [vmem:[#allocation3 + $0x108] sm:$0xff]
    %v66 = vld [vmem:[#allocation3 + $0x110] sm:$0xff]
    %v67 = vld [vmem:[#allocation3 + $0x118] sm:$0xff]
    %v68 = vld [vmem:[#allocation3 + $0x120] sm:$0xff]
    %v69 = vld [vmem:[#allocation3 + $0x128] sm:$0xff]
    %v70 = vld [vmem:[#allocation3 + $0x130] sm:$0xff]
    %v71 = vld [vmem:[#allocation3 + $0x138] sm:$0xff]
    %v72 = vld [vmem:[#allocation3 + $0x140] sm:$0xff]
    %v73 = vld [vmem:[#allocation3 + $0x148] sm:$0xff]
    %v74 = vld [vmem:[#allocation3 + $0x150] sm:$0xff]
    %v75 = vld [vmem:[#allocation3 + $0x158] sm:$0xff]
    %v76 = vld [vmem:[#allocation3 + $0x160] sm:$0xff]
    %v77 = vld [vmem:[#allocation3 + $0x168] sm:$0xff]
    %v78 = vld [vmem:[#allocation3 + $0x170] sm:$0xff]
    %v79 = vld [vmem:[#allocation3 + $0x178] sm:$0xff]
    %v80 = vld [vmem:[#allocation3 + $0x180] sm:$0xff]
    %v81 = vld [vmem:[#allocation3 + $0x188] sm:$0x1]
    %v82 = vld [vmem:[#allocation3 + $0x190] sm:$0x1]
    %v83 = vld [vmem:[#allocation3 + $0x198] sm:$0x1]
    %v84 = vld [vmem:[#allocation3 + $0x1a0] sm:$0x1]
    %v85 = vlaneseq
    %v86 = vshrl.u32 %v85, 7
    %v87 = vsub.s32 0, %v86
    %v88 = vrot.slane %v81, %v87
    %v90 = vsel %vm26, %v31, 0
    %92 = vmatprep.subr.mxu0 0.0
    %93 = vmatpush1.msra.mxu0 %v32
    %94 = vmatprep.subr.mxu0 0.0
    %95 = vmatpush1.msra.mxu0 0.0
    %96 = vmatprep.subr.mxu0 0.0
    %97 = vmatpush1.msra.mxu0 0.0
    %98 = vmatprep.subr.mxu0 0.0
    %99 = vmatpush1.msra.mxu0 0.0
    %100 = vmatprep.subr.mxu0 0.0
    %101 = vmatpush1.msra.mxu0 0.0
    %102 = vmatprep.subr.mxu0 0.0
    %103 = vmatpush1.msra.mxu0 0.0
    %104 = vmatprep.subr.mxu0 0.0
    %105 = vmatpush1.msra.mxu0 0.0
    %106 = vmatprep.subr.mxu0 0.0
    %107 = vmatpush1.msra.mxu0 0.0
    %108 = vmatprep.subr.mxu0 0.0
    %109 = vmatpush1.msra.mxu0 0.0
    %110 = vmatprep.subr.mxu0 0.0
    %111 = vmatpush1.msra.mxu0 0.0
    %112 = vmatprep.subr.mxu0 0.0
    %113 = vmatpush1.msra.mxu0 0.0
    %114 = vmatprep.subr.mxu0 0.0
    %115 = vmatpush1.msra.mxu0 0.0
    %116 = vmatprep.subr.mxu0 0.0
    %117 = vmatpush1.msra.mxu0 0.0
    %118 = vmatprep.subr.mxu0 0.0
    %119 = vmatpush1.msra.mxu0 0.0
    %120 = vmatprep.subr.mxu0 0.0
    %121 = vmatpush1.msra.mxu0 0.0
    %122 = vmatprep.subr.mxu0 0.0
    %123 = vmatpush1.msra.mxu0 0.0
    %124 = vmatprep.subr.mxu0 0.0
    %125 = vmatpush1.msra.mxu0 0.0
    %126 = vmatprep.subr.mxu0 0.0
    %127 = vmatpush1.msra.mxu0 0.0
    %128 = vmatprep.subr.mxu0 0.0
    %129 = vmatpush1.msra.mxu0 0.0
    %130 = vmatprep.subr.mxu0 0.0
    %131 = vmatpush1.msra.mxu0 0.0
    %132 = vmatprep.subr.mxu0 0.0
    %133 = vmatpush1.msra.mxu0 0.0
    %134 = vmatprep.subr.mxu0 0.0
    %135 = vmatpush1.msra.mxu0 0.0
    %136 = vmatprep.subr.mxu0 0.0
    %137 = vmatpush1.msra.mxu0 0.0
    %138 = vmatprep.subr.mxu0 0.0
    %139 = vmatpush1.msra.mxu0 0.0
    %140 = vmatprep.subr.mxu0 0.0
    %141 = vmatpush1.msra.mxu0 0.0
    %142 = vmatprep.subr.mxu0 0.0
    %143 = vmatpush1.msra.mxu0 0.0
    %144 = vmatprep.subr.mxu0 0.0
    %145 = vmatpush1.msra.mxu0 0.0
    %146 = vmatprep.subr.mxu0 0.0
    %147 = vmatpush1.msra.mxu0 0.0
    %148 = vmatprep.subr.mxu0 0.0
    %149 = vmatpush1.msra.mxu0 0.0
    %150 = vmatprep.subr.mxu0 0.0
    %151 = vmatpush1.msra.mxu0 0.0
    %152 = vmatprep.subr.mxu0 0.0
    %153 = vmatpush1.msra.mxu0 0.0
    %154 = vmatprep.subr.mxu0 0.0
    %155 = vmatpush1.msra.mxu0 0.0
    %156 = vmatprep.mubr.f32.mxu0 0.0
    %157 = vmatmul.mubr.f32.gmra.mrb[0].mxu0 %v90
    %v158 = vpop.f32.mrb[0].mxu0
    %v159 = vadd.f32 %v88, %v158
    %v160 = vpop.f32.mrb[0].mxu0
    %161 = vdwg.mxu0
    %v162 = vmax.f32 %v159, 0.0
    %v163 = vlaneseq
    %v164 = vshrl.u32 %v163, 7
    %v165 = vsub.s32 0, %v164
    %v166 = vrot.slane %v82, %v165
    %167 = vmatprep.subr.mxu0 0.0
    %168 = vmatpush1.msra.mxu0 %v33
    %169 = vmatprep.subr.mxu0 0.0
    %170 = vmatpush1.msra.mxu0 %v34
    %171 = vmatprep.subr.mxu0 0.0
    %172 = vmatpush1.msra.mxu0 %v35
    %173 = vmatprep.subr.mxu0 0.0
    %174 = vmatpush1.msra.mxu0 %v36
    %175 = vmatprep.subr.mxu0 0.0
    %176 = vmatpush1.msra.mxu0 %v37
    %177 = vmatprep.subr.mxu0 0.0
    %178 = vmatpush1.msra.mxu0 %v38
    %179 = vmatprep.subr.mxu0 0.0
    %180 = vmatpush1.msra.mxu0 %v39
    %181 = vmatprep.subr.mxu0 0.0
    %182 = vmatpush1.msra.mxu0 %v40
    %183 = vmatprep.subr.mxu0 0.0
    %184 = vmatpush1.msra.mxu0 %v41
    %185 = vmatprep.subr.mxu0 0.0
    %186 = vmatpush1.msra.mxu0 %v42
    %187 = vmatprep.subr.mxu0 0.0
    %188 = vmatpush1.msra.mxu0 %v43
    %189 = vmatprep.subr.mxu0 0.0
    %190 = vmatpush1.msra.mxu0 %v44
    %191 = vmatprep.subr.mxu0 0.0
    %192 = vmatpush1.msra.mxu0 %v45
    %193 = vmatprep.subr.mxu0 0.0
    %194 = vmatpush1.msra.mxu0 %v46
    %195 = vmatprep.subr.mxu0 0.0
    %196 = vmatpush1.msra.mxu0 %v47
    %197 = vmatprep.subr.mxu0 0.0
    %198 = vmatpush1.msra.mxu0 %v48
    %199 = vmatprep.subr.mxu0 0.0
    %200 = vmatpush1.msra.mxu0 0.0
    %201 = vmatprep.subr.mxu0 0.0
    %202 = vmatpush1.msra.mxu0 0.0
    %203 = vmatprep.subr.mxu0 0.0
    %204 = vmatpush1.msra.mxu0 0.0
    %205 = vmatprep.subr.mxu0 0.0
    %206 = vmatpush1.msra.mxu0 0.0
    %207 = vmatprep.subr.mxu0 0.0
    %208 = vmatpush1.msra.mxu0 0.0
    %209 = vmatprep.subr.mxu0 0.0
    %210 = vmatpush1.msra.mxu0 0.0
    %211 = vmatprep.subr.mxu0 0.0
    %212 = vmatpush1.msra.mxu0 0.0
    %213 = vmatprep.subr.mxu0 0.0
    %214 = vmatpush1.msra.mxu0 0.0
    %215 = vmatprep.subr.mxu0 0.0
    %216 = vmatpush1.msra.mxu0 0.0
    %217 = vmatprep.subr.mxu0 0.0
    %218 = vmatpush1.msra.mxu0 0.0
    %219 = vmatprep.subr.mxu0 0.0
    %220 = vmatpush1.msra.mxu0 0.0
    %221 = vmatprep.subr.mxu0 0.0
    %222 = vmatpush1.msra.mxu0 0.0
    %223 = vmatprep.subr.mxu0 0.0
    %224 = vmatpush1.msra.mxu0 0.0
    %225 = vmatprep.subr.mxu0 0.0
    %226 = vmatpush1.msra.mxu0 0.0
    %227 = vmatprep.subr.mxu0 0.0
    %228 = vmatpush1.msra.mxu0 0.0
    %229 = vmatprep.subr.mxu0 0.0
    %230 = vmatpush1.msra.mxu0 0.0
    %231 = vmatprep.mubr.f32.mxu0 0.0
    %232 = vmatmul.mubr.f32.gmra.mrb[0].mxu0 %v162
    %v233 = vpop.f32.mrb[0].mxu0
    %v234 = vadd.f32 %v166, %v233
    %v235 = vpop.f32.mrb[0].mxu0
    %236 = vdwg.mxu0
    %v237 = vmax.f32 %v234, 0.0
    %v238 = vlaneseq
    %v239 = vshrl.u32 %v238, 7
    %v240 = vsub.s32 0, %v239
    %v241 = vrot.slane %v83, %v240
    %242 = vmatprep.subr.mxu0 0.0
    %243 = vmatpush1.msra.mxu0 %v49
    %244 = vmatprep.subr.mxu0 0.0
    %245 = vmatpush1.msra.mxu0 %v50
    %246 = vmatprep.subr.mxu0 0.0
    %247 = vmatpush1.msra.mxu0 %v51
    %248 = vmatprep.subr.mxu0 0.0
    %249 = vmatpush1.msra.mxu0 %v52
    %250 = vmatprep.subr.mxu0 0.0
    %251 = vmatpush1.msra.mxu0 %v53
    %252 = vmatprep.subr.mxu0 0.0
    %253 = vmatpush1.msra.mxu0 %v54
    %254 = vmatprep.subr.mxu0 0.0
    %255 = vmatpush1.msra.mxu0 %v55
    %256 = vmatprep.subr.mxu0 0.0
    %257 = vmatpush1.msra.mxu0 %v56
    %258 = vmatprep.subr.mxu0 0.0
    %259 = vmatpush1.msra.mxu0 %v57
    %260 = vmatprep.subr.mxu0 0.0
    %261 = vmatpush1.msra.mxu0 %v58
    %262 = vmatprep.subr.mxu0 0.0
    %263 = vmatpush1.msra.mxu0 %v59
    %264 = vmatprep.subr.mxu0 0.0
    %265 = vmatpush1.msra.mxu0 %v60
    %266 = vmatprep.subr.mxu0 0.0
    %267 = vmatpush1.msra.mxu0 %v61
    %268 = vmatprep.subr.mxu0 0.0
    %269 = vmatpush1.msra.mxu0 %v62
    %270 = vmatprep.subr.mxu0 0.0
    %271 = vmatpush1.msra.mxu0 %v63
    %272 = vmatprep.subr.mxu0 0.0
    %273 = vmatpush1.msra.mxu0 %v64
    %274 = vmatprep.subr.mxu0 0.0
    %275 = vmatpush1.msra.mxu0 0.0
    %276 = vmatprep.subr.mxu0 0.0
    %277 = vmatpush1.msra.mxu0 0.0
    %278 = vmatprep.subr.mxu0 0.0
    %279 = vmatpush1.msra.mxu0 0.0
    %280 = vmatprep.subr.mxu0 0.0
    %281 = vmatpush1.msra.mxu0 0.0
    %282 = vmatprep.subr.mxu0 0.0
    %283 = vmatpush1.msra.mxu0 0.0
    %284 = vmatprep.subr.mxu0 0.0
    %285 = vmatpush1.msra.mxu0 0.0
    %286 = vmatprep.subr.mxu0 0.0
    %287 = vmatpush1.msra.mxu0 0.0
    %288 = vmatprep.subr.mxu0 0.0
    %289 = vmatpush1.msra.mxu0 0.0
    %290 = vmatprep.subr.mxu0 0.0
    %291 = vmatpush1.msra.mxu0 0.0
    %292 = vmatprep.subr.mxu0 0.0
    %293 = vmatpush1.msra.mxu0 0.0
    %294 = vmatprep.subr.mxu0 0.0
    %295 = vmatpush1.msra.mxu0 0.0
    %296 = vmatprep.subr.mxu0 0.0
    %297 = vmatpush1.msra.mxu0 0.0
    %298 = vmatprep.subr.mxu0 0.0
    %299 = vmatpush1.msra.mxu0 0.0
    %300 = vmatprep.subr.mxu0 0.0
    %301 = vmatpush1.msra.mxu0 0.0
    %302 = vmatprep.subr.mxu0 0.0
    %303 = vmatpush1.msra.mxu0 0.0
    %304 = vmatprep.subr.mxu0 0.0
    %305 = vmatpush1.msra.mxu0 0.0
    %306 = vmatprep.mubr.f32.mxu0 0.0
    %307 = vmatmul.mubr.f32.gmra.mrb[0].mxu0 %v237
    %v308 = vpop.f32.mrb[0].mxu0
    %v309 = vadd.f32 %v241, %v308
    %v310 = vpop.f32.mrb[0].mxu0
    %311 = vdwg.mxu0
    %v312 = vmax.f32 %v309, 0.0
    %v313 = vlaneseq
    %v314 = vshrl.u32 %v313, 7
    %v315 = vsub.s32 0, %v314
    %v316 = vrot.slane %v84, %v315
    %317 = vmatprep.subr.mxu0 0.0
    %318 = vmatpush1.msra.mxu0 %v65
    %319 = vmatprep.subr.mxu0 0.0
    %320 = vmatpush1.msra.mxu0 %v66
    %321 = vmatprep.subr.mxu0 0.0
    %322 = vmatpush1.msra.mxu0 %v67
    %323 = vmatprep.subr.mxu0 0.0
    %324 = vmatpush1.msra.mxu0 %v68
    %325 = vmatprep.subr.mxu0 0.0
    %326 = vmatpush1.msra.mxu0 %v69
    %327 = vmatprep.subr.mxu0 0.0
    %328 = vmatpush1.msra.mxu0 %v70
    %329 = vmatprep.subr.mxu0 0.0
    %330 = vmatpush1.msra.mxu0 %v71
    %331 = vmatprep.subr.mxu0 0.0
    %332 = vmatpush1.msra.mxu0 %v72
    %333 = vmatprep.subr.mxu0 0.0
    %334 = vmatpush1.msra.mxu0 %v73
    %335 = vmatprep.subr.mxu0 0.0
    %336 = vmatpush1.msra.mxu0 %v74
    %337 = vmatprep.subr.mxu0 0.0
    %338 = vmatpush1.msra.mxu0 %v75
    %339 = vmatprep.subr.mxu0 0.0
    %340 = vmatpush1.msra.mxu0 %v76
    %341 = vmatprep.subr.mxu0 0.0
    %342 = vmatpush1.msra.mxu0 %v77
    %343 = vmatprep.subr.mxu0 0.0
    %344 = vmatpush1.msra.mxu0 %v78
    %345 = vmatprep.subr.mxu0 0.0
    %346 = vmatpush1.msra.mxu0 %v79
    %347 = vmatprep.subr.mxu0 0.0
    %348 = vmatpush1.msra.mxu0 %v80
    %349 = vmatprep.subr.mxu0 0.0
    %350 = vmatpush1.msra.mxu0 0.0
    %351 = vmatprep.subr.mxu0 0.0
    %352 = vmatpush1.msra.mxu0 0.0
    %353 = vmatprep.subr.mxu0 0.0
    %354 = vmatpush1.msra.mxu0 0.0
    %355 = vmatprep.subr.mxu0 0.0
    %356 = vmatpush1.msra.mxu0 0.0
    %357 = vmatprep.subr.mxu0 0.0
    %358 = vmatpush1.msra.mxu0 0.0
    %359 = vmatprep.subr.mxu0 0.0
    %360 = vmatpush1.msra.mxu0 0.0
    %361 = vmatprep.subr.mxu0 0.0
    %362 = vmatpush1.msra.mxu0 0.0
    %363 = vmatprep.subr.mxu0 0.0
    %364 = vmatpush1.msra.mxu0 0.0
    %365 = vmatprep.subr.mxu0 0.0
    %366 = vmatpush1.msra.mxu0 0.0
    %367 = vmatprep.subr.mxu0 0.0
    %368 = vmatpush1.msra.mxu0 0.0
    %369 = vmatprep.subr.mxu0 0.0
    %370 = vmatpush1.msra.mxu0 0.0
    %371 = vmatprep.subr.mxu0 0.0
    %372 = vmatpush1.msra.mxu0 0.0
    %373 = vmatprep.subr.mxu0 0.0
    %374 = vmatpush1.msra.mxu0 0.0
    %375 = vmatprep.subr.mxu0 0.0
    %376 = vmatpush1.msra.mxu0 0.0
    %377 = vmatprep.subr.mxu0 0.0
    %378 = vmatpush1.msra.mxu0 0.0
    %379 = vmatprep.subr.mxu0 0.0
    %380 = vmatpush1.msra.mxu0 0.0
    %381 = vmatprep.mubr.f32.mxu0 0.0
    %382 = vmatmul.mubr.f32.gmra.mrb[0].mxu0 %v312
    %v383 = vpop.f32.mrb[0].mxu0
    %v384 = vadd.f32 %v316, %v383
    %v385 = vpop.f32.mrb[0].mxu0
    %386 = vdwg.mxu0
    %v387 = vlaneseq
    %v388 = vand.u32 %v387, 127
    %v389 = vtanh.pop %v384
    %v390 = vmul.f32 %v389, 2.0
    %v391 = vmax.f32 %v384, 0.0
    %vm392 = vcmp.ne.f32.partialorder %v384, %v384
    %v393 = vadd.f32 %v384, 0.0
    %v394 = vand.u32 2147483647, %v384
    %v395 = vsub.f32 0.0, %v394
    %v396 = vmul.f32 %v395, 1.442695
    %v397 = vpow.pop %v396
    %v398 = vadd.f32 %v397, 1.0
    %v399 = vlog2.pop %v398
    %v400 = vmul.f32 %v399, 0.6931472
    %v401 = vmul.f32 -0.5, %v397
    %v402 = vadd.f32 %v401, 1.0
    %v403 = vmul.f32 %v402, %v397
    %v404 = vand.u32 2147483647, %v397
    %vm405 = vcmp.lt.f32.partialorder %v404, 0.0004427343
    %v406 = vsel %vm405, %v403, %v400
    %v407 = vadd.f32 %v391, %v406
    %v408 = vsel %vm392, %v393, %v407
    %vm409 = vcmp.lt.s32.totalorder %v388, 1
    %v410 = vsel %vm409, 1, 0
    %vm411 = vcmp.eq.s32.totalorder %v410, 1
    %v412 = vsel %vm411, %v390, %v408
    %413 = vst [vmem:[#allocation6] sm:$0xff] %v412
    // Predicated region
    $region14: #{tpu_custom_call.1} parent=1 // pred_check
      _
    $region15: #{tpu_custom_call.1} parent=1 // pred_check_branch
      %415 = sbr.rel (0) target = $region17
    $region16: #{tpu_custom_call.1} parent=1 // pred_region
      %s417 = ssub.s32 128, 128
      %418 = vsyncadd [#allocation5], %s417
      %s420 = sshll.u32 [#allocation6], 4
      %s421 = int_to_ptr.vmem [resolvable:$true] %s420
      %423 = dma.vmem_to_hbm [thread:$0]  %s421, 128, %s2, [#allocation5]
    $region17: #{tpu_custom_call.1} parent=1 // pred_fallthru
      _
    // Predicated region
    $region18: #{tpu_custom_call.1} parent=1 // pred_check
      _
    $region19: #{tpu_custom_call.1} parent=1 // pred_check_branch
      %425 = sbr.rel (0) target = $region21
    $region20: #{tpu_custom_call.1} parent=1 // pred_region
      %426 = dma.done [#allocation5], 128
    $region21: #{tpu_custom_call.1} parent=1 // pred_fallthru
      _
    %427 = vsyncpa [#allocation4], 1
    %428 = vsyncpa [#allocation5], 1

</llo_original>
